<compile_context>
chip_gen: v7x
topology: tpu7x:2x2x1
jax: 0.10.0
libtpu: 0.0.40
codegen_flags: <defaults>
</compile_context>

<pallas_src>
import functools
import math

import numpy as np

import jax
import jax.numpy as jnp
from jax.experimental import pallas as pl
from jax.experimental.pallas import tpu as pltpu


_SUBLANES = 8
_LANES = 128


def _make_frequencies(max_res=15.0, min_res=15.0 / 2000.0, div_factor=4):
    """float32 frequencies with the same arithmetic as the PyTorch module."""
    n_frequencies = int(math.log(max_res / min_res, div_factor)) + 1
    k = np.arange(n_frequencies, dtype=np.float32)
    freqs = (np.float32(2.0 * math.pi) * (np.float32(div_factor) ** k)
             / np.float32(max_res))
    return freqs  # np.float32, shape (n_frequencies,)


def _sinusoids_kernel(x_ref, out_ref, *, freqs):
    # x_ref:   (8, tile_l)             f32   edge axis folded onto (sublane, lane)
    # out_ref: (2, n_freq, 8, tile_l)  f32/bf16  ([sin|cos], frequency, sublane, lane)
    xs = jnp.sqrt(x_ref[...] + 1e-8)                        # (8, tile_l), dense vregs
    # Per-frequency scalar multiply + sin/cos, each written as a dense,
    # (8,128)-aligned slab store (no concatenate, no masked vst).
    for k, f in enumerate(freqs):
        e = xs * jnp.float32(f)                             # (8, tile_l)
        out_ref[0, k] = jnp.sin(e).astype(out_ref.dtype)
        out_ref[1, k] = jnp.cos(e).astype(out_ref.dtype)


def sinusoids_embedding_slab(x, max_res=15.0, min_res=15.0 / 2000.0,
                             div_factor=4, tile_n=65536, out_dtype=jnp.float32):
    """Fast path.

    x: (N, 1) float32 squared distances.
    Returns the lane-dense slab (2*n_frequencies, N): rows are
    [sin(f0)..sin(f5), cos(f0)..cos(f5)], edges on the last (lane) axis.
    """
    assert x.ndim == 2 and x.shape[1] == 1, "expected (N, 1) input"
    n = x.shape[0]

    freqs_np = _make_frequencies(max_res, min_res, div_factor)
    n_freq = int(freqs_np.shape[0])
    freqs = tuple(float(f) for f in freqs_np)               # exact f32 values
    out_dim = 2 * n_freq

    # ---- tiling: edge axis -> (8 sublanes, L lanes), L tiled along the grid.
    # Lanes needed at 128 granularity to cover N edges.
    need_l = pl.cdiv(n, _SUBLANES * _LANES) * _LANES
    tile_l = max(_LANES, (min(int(tile_n) // _SUBLANES, need_l) // _LANES) * _LANES)
    # Prefer >= 2 grid steps when there is enough work so both v7x TensorCores
    # (dimension_semantics="parallel") have something to do.
    if need_l <= tile_l and need_l >= 2 * _LANES:
        tile_l = pl.cdiv(pl.cdiv(need_l, 2), _LANES) * _LANES
    num_tiles = pl.cdiv(need_l, tile_l)
    l_total = num_tiles * tile_l
    n_pad = _SUBLANES * l_total

    # Pad N up to 8 * l_total and fold onto (8, l_total); padded tail elements
    # compute sin/cos of sqrt(1e-8)*f (finite) and are sliced away below.
    x_flat = jnp.pad(x[:, 0].astype(jnp.float32), (0, n_pad - n))
    x_fold = x_flat.reshape(_SUBLANES, l_total)

    kernel = functools.partial(_sinusoids_kernel, freqs=freqs)
    out_bytes = jnp.dtype(out_dtype).itemsize

    out = pl.pallas_call(
        kernel,
        out_shape=jax.ShapeDtypeStruct((2, n_freq, _SUBLANES, l_total), out_dtype),
        grid_spec=pltpu.PrefetchScalarGridSpec(
            num_scalar_prefetch=0,
            grid=(num_tiles,),
            in_specs=[pl.BlockSpec((_SUBLANES, tile_l), lambda i: (0, i))],
            out_specs=pl.BlockSpec((2, n_freq, _SUBLANES, tile_l),
                                   lambda i: (0, 0, 0, i)),
        ),
        compiler_params=pltpu.CompilerParams(
            dimension_semantics=("parallel",),
        ),
        cost_estimate=pl.CostEstimate(
            flops=int(n_pad * (1 + 2 * n_freq)),
            transcendentals=int(n_pad * (2 * n_freq + 1)),
            bytes_accessed=int(n_pad * (4 + out_bytes * 2 * n_freq)),
        ),
    )(x_fold)

    # (2, n_freq, 8, l_total) -> (12, n_pad); edge index p = sublane*l_total + lane
    # matches the fold above, so this reshape is pure bookkeeping (no transpose).
    return out.reshape(out_dim, n_pad)[:, :n]


def sinusoids_embedding(x, max_res=15.0, min_res=15.0 / 2000.0, div_factor=4,
                        tile_n=65536, out_dtype=jnp.float32):
    """PyTorch-compatible layout: (N, 2*n_frequencies) = concat(sin, cos).

    Prefer sinusoids_embedding_slab() when the consumer can take the (12, N)
    slab (e.g. when fusing into the GCL edge-MLP); this wrapper's transpose
    costs an extra full HBM round-trip of the output.
    """
    return sinusoids_embedding_slab(x, max_res, min_res, div_factor,
                                    tile_n, out_dtype).T


def _reference(x, max_res=15.0, min_res=15.0 / 2000.0, div_factor=4):
    freqs = jnp.asarray(_make_frequencies(max_res, min_res, div_factor))
    xs = jnp.sqrt(x + 1e-8)
    emb = xs * freqs[None, :]
    return jnp.concatenate([jnp.sin(emb), jnp.cos(emb)], axis=-1)


if __name__ == "__main__":
    key = jax.random.PRNGKey(0)

    # Small EGNN-style graph: 16 nodes, fully connected (no self loops) -> 240
    # edges (deliberately NOT a multiple of 128/1024 to exercise padding).
    n_nodes = 16
    coords = 0.1 * jax.random.normal(key, (n_nodes, 3), dtype=jnp.float32)

    idx = np.arange(n_nodes)
    rows, cols = np.meshgrid(idx, idx, indexing="ij")
    mask = rows != cols
    row = jnp.asarray(rows[mask])
    col = jnp.asarray(cols[mask])

    # coord2diff radial term (the kernel input x = |xi - xj|^2)
    coord_diff = coords[row] - coords[col]
    radial = jnp.sum(coord_diff ** 2, axis=1, keepdims=True)     # (240, 1)
    n_edges = radial.shape[0]

    # Fast path: lane-dense (12, N) slab straight out of the kernel.
    slab = sinusoids_embedding_slab(radial)
    slab = jax.block_until_ready(slab)
    assert slab.shape == (12, n_edges), slab.shape

    # PyTorch-layout view for the semantic check against the reference.
    out_compat = slab.T                                          # (N, 12)
    ref = _reference(radial)
    assert out_compat.shape == ref.shape, (out_compat.shape, ref.shape)
    assert jnp.allclose(out_compat, ref, atol=3e-4, rtol=3e-4), "mismatch vs reference"

    print("KERNEL_OK")
</pallas_src>

<mosaic_0001>
module attributes {stable_mosaic.version = 11 : i64} {
  func.func @_sinusoids_kernel(%arg0: i32, %arg1: memref<8x128xf32, #tpu.memory_space<vmem>>, %arg2: memref<2x6x8x128xf32, #tpu.memory_space<vmem>>) attributes {dimension_semantics = [#tpu.dimension_semantics<parallel>], iteration_bounds = array<i64: 1>, scalar_prefetch = 0 : i64, scratch_operands = 0 : i64, tpu.core_type = #tpu.core_type<tc>, window_params = [{transform_indices = @transform_0, window_bounds = array<i64: 8, 128>}, {transform_indices = @transform_1, window_bounds = array<i64: 2, 6, 8, 128>}]} {
    %c0 = arith.constant 0 : index
    %c0_0 = arith.constant 0 : index
    %0 = vector.load %arg1[%c0, %c0_0] : memref<8x128xf32, #tpu.memory_space<vmem>>, vector<8x128xf32>
    %cst = arith.constant 9.99999993E-9 : f32
    %1 = vector.broadcast %cst : f32 to vector<8x128xf32>
    %2 = arith.addf %0, %1 : vector<8x128xf32>
    %3 = math.sqrt %2 : vector<8x128xf32>
    %cst_1 = arith.constant 0.418879032 : f32
    %4 = vector.broadcast %cst_1 : f32 to vector<8x128xf32>
    %5 = arith.mulf %3, %4 : vector<8x128xf32>
    %6 = math.sin %5 : vector<8x128xf32>
    %c0_2 = arith.constant 0 : index
    %c0_3 = arith.constant 0 : index
    %c0_4 = arith.constant 0 : index
    %c0_5 = arith.constant 0 : index
    %7 = vector.load %arg2[%c0_2, %c0_3, %c0_4, %c0_5] : memref<2x6x8x128xf32, #tpu.memory_space<vmem>>, vector<1x1x8x128xf32>
    %8 = vector.shape_cast %7 : vector<1x1x8x128xf32> to vector<8x128xf32>
    %9 = vector.shape_cast %6 : vector<8x128xf32> to vector<1x1x8x128xf32>
    tpu.vector_store %arg2[%c0_2, %c0_3, %c0_4, %c0_5], %9 {strides = array<i32>} : memref<2x6x8x128xf32, #tpu.memory_space<vmem>>, vector<1x1x8x128xf32>,
    %10 = math.cos %5 : vector<8x128xf32>
    %c1 = arith.constant 1 : index
    %c0_6 = arith.constant 0 : index
    %c0_7 = arith.constant 0 : index
    %c0_8 = arith.constant 0 : index
    %11 = vector.load %arg2[%c1, %c0_6, %c0_7, %c0_8] : memref<2x6x8x128xf32, #tpu.memory_space<vmem>>, vector<1x1x8x128xf32>
    %12 = vector.shape_cast %11 : vector<1x1x8x128xf32> to vector<8x128xf32>
    %13 = vector.shape_cast %10 : vector<8x128xf32> to vector<1x1x8x128xf32>
    tpu.vector_store %arg2[%c1, %c0_6, %c0_7, %c0_8], %13 {strides = array<i32>} : memref<2x6x8x128xf32, #tpu.memory_space<vmem>>, vector<1x1x8x128xf32>,
    %cst_9 = arith.constant 1.67551613 : f32
    %14 = vector.broadcast %cst_9 : f32 to vector<8x128xf32>
    %15 = arith.mulf %3, %14 : vector<8x128xf32>
    %16 = math.sin %15 : vector<8x128xf32>
    %c0_10 = arith.constant 0 : index
    %c1_11 = arith.constant 1 : index
    %c0_12 = arith.constant 0 : index
    %c0_13 = arith.constant 0 : index
    %17 = vector.load %arg2[%c0_10, %c1_11, %c0_12, %c0_13] : memref<2x6x8x128xf32, #tpu.memory_space<vmem>>, vector<1x1x8x128xf32>
    %18 = vector.shape_cast %17 : vector<1x1x8x128xf32> to vector<8x128xf32>
    %19 = vector.shape_cast %16 : vector<8x128xf32> to vector<1x1x8x128xf32>
    tpu.vector_store %arg2[%c0_10, %c1_11, %c0_12, %c0_13], %19 {strides = array<i32>} : memref<2x6x8x128xf32, #tpu.memory_space<vmem>>, vector<1x1x8x128xf32>,
    %20 = math.cos %15 : vector<8x128xf32>
    %c1_14 = arith.constant 1 : index
    %c1_15 = arith.constant 1 : index
    %c0_16 = arith.constant 0 : index
    %c0_17 = arith.constant 0 : index
    %21 = vector.load %arg2[%c1_14, %c1_15, %c0_16, %c0_17] : memref<2x6x8x128xf32, #tpu.memory_space<vmem>>, vector<1x1x8x128xf32>
    %22 = vector.shape_cast %21 : vector<1x1x8x128xf32> to vector<8x128xf32>
    %23 = vector.shape_cast %20 : vector<8x128xf32> to vector<1x1x8x128xf32>
    tpu.vector_store %arg2[%c1_14, %c1_15, %c0_16, %c0_17], %23 {strides = array<i32>} : memref<2x6x8x128xf32, #tpu.memory_space<vmem>>, vector<1x1x8x128xf32>,
    %cst_18 = arith.constant 6.70206451 : f32
    %24 = vector.broadcast %cst_18 : f32 to vector<8x128xf32>
    %25 = arith.mulf %3, %24 : vector<8x128xf32>
    %26 = math.sin %25 : vector<8x128xf32>
    %c0_19 = arith.constant 0 : index
    %c2 = arith.constant 2 : index
    %c0_20 = arith.constant 0 : index
    %c0_21 = arith.constant 0 : index
    %27 = vector.load %arg2[%c0_19, %c2, %c0_20, %c0_21] : memref<2x6x8x128xf32, #tpu.memory_space<vmem>>, vector<1x1x8x128xf32>
    %28 = vector.shape_cast %27 : vector<1x1x8x128xf32> to vector<8x128xf32>
    %29 = vector.shape_cast %26 : vector<8x128xf32> to vector<1x1x8x128xf32>
    tpu.vector_store %arg2[%c0_19, %c2, %c0_20, %c0_21], %29 {strides = array<i32>} : memref<2x6x8x128xf32, #tpu.memory_space<vmem>>, vector<1x1x8x128xf32>,
    %30 = math.cos %25 : vector<8x128xf32>
    %c1_22 = arith.constant 1 : index
    %c2_23 = arith.constant 2 : index
    %c0_24 = arith.constant 0 : index
    %c0_25 = arith.constant 0 : index
    %31 = vector.load %arg2[%c1_22, %c2_23, %c0_24, %c0_25] : memref<2x6x8x128xf32, #tpu.memory_space<vmem>>, vector<1x1x8x128xf32>
    %32 = vector.shape_cast %31 : vector<1x1x8x128xf32> to vector<8x128xf32>
    %33 = vector.shape_cast %30 : vector<8x128xf32> to vector<1x1x8x128xf32>
    tpu.vector_store %arg2[%c1_22, %c2_23, %c0_24, %c0_25], %33 {strides = array<i32>} : memref<2x6x8x128xf32, #tpu.memory_space<vmem>>, vector<1x1x8x128xf32>,
    %cst_26 = arith.constant 26.8082581 : f32
    %34 = vector.broadcast %cst_26 : f32 to vector<8x128xf32>
    %35 = arith.mulf %3, %34 : vector<8x128xf32>
    %36 = math.sin %35 : vector<8x128xf32>
    %c0_27 = arith.constant 0 : index
    %c3 = arith.constant 3 : index
    %c0_28 = arith.constant 0 : index
    %c0_29 = arith.constant 0 : index
    %37 = vector.load %arg2[%c0_27, %c3, %c0_28, %c0_29] : memref<2x6x8x128xf32, #tpu.memory_space<vmem>>, vector<1x1x8x128xf32>
    %38 = vector.shape_cast %37 : vector<1x1x8x128xf32> to vector<8x128xf32>
    %39 = vector.shape_cast %36 : vector<8x128xf32> to vector<1x1x8x128xf32>
    tpu.vector_store %arg2[%c0_27, %c3, %c0_28, %c0_29], %39 {strides = array<i32>} : memref<2x6x8x128xf32, #tpu.memory_space<vmem>>, vector<1x1x8x128xf32>,
    %40 = math.cos %35 : vector<8x128xf32>
    %c1_30 = arith.constant 1 : index
    %c3_31 = arith.constant 3 : index
    %c0_32 = arith.constant 0 : index
    %c0_33 = arith.constant 0 : index
    %41 = vector.load %arg2[%c1_30, %c3_31, %c0_32, %c0_33] : memref<2x6x8x128xf32, #tpu.memory_space<vmem>>, vector<1x1x8x128xf32>
    %42 = vector.shape_cast %41 : vector<1x1x8x128xf32> to vector<8x128xf32>
    %43 = vector.shape_cast %40 : vector<8x128xf32> to vector<1x1x8x128xf32>
    tpu.vector_store %arg2[%c1_30, %c3_31, %c0_32, %c0_33], %43 {strides = array<i32>} : memref<2x6x8x128xf32, #tpu.memory_space<vmem>>, vector<1x1x8x128xf32>,
    %cst_34 = arith.constant 107.233032 : f32
    %44 = vector.broadcast %cst_34 : f32 to vector<8x128xf32>
    %45 = arith.mulf %3, %44 : vector<8x128xf32>
    %46 = math.sin %45 : vector<8x128xf32>
    %c0_35 = arith.constant 0 : index
    %c4 = arith.constant 4 : index
    %c0_36 = arith.constant 0 : index
    %c0_37 = arith.constant 0 : index
    %47 = vector.load %arg2[%c0_35, %c4, %c0_36, %c0_37] : memref<2x6x8x128xf32, #tpu.memory_space<vmem>>, vector<1x1x8x128xf32>
    %48 = vector.shape_cast %47 : vector<1x1x8x128xf32> to vector<8x128xf32>
    %49 = vector.shape_cast %46 : vector<8x128xf32> to vector<1x1x8x128xf32>
    tpu.vector_store %arg2[%c0_35, %c4, %c0_36, %c0_37], %49 {strides = array<i32>} : memref<2x6x8x128xf32, #tpu.memory_space<vmem>>, vector<1x1x8x128xf32>,
    %50 = math.cos %45 : vector<8x128xf32>
    %c1_38 = arith.constant 1 : index
    %c4_39 = arith.constant 4 : index
    %c0_40 = arith.constant 0 : index
    %c0_41 = arith.constant 0 : index
    %51 = vector.load %arg2[%c1_38, %c4_39, %c0_40, %c0_41] : memref<2x6x8x128xf32, #tpu.memory_space<vmem>>, vector<1x1x8x128xf32>
    %52 = vector.shape_cast %51 : vector<1x1x8x128xf32> to vector<8x128xf32>
    %53 = vector.shape_cast %50 : vector<8x128xf32> to vector<1x1x8x128xf32>
    tpu.vector_store %arg2[%c1_38, %c4_39, %c0_40, %c0_41], %53 {strides = array<i32>} : memref<2x6x8x128xf32, #tpu.memory_space<vmem>>, vector<1x1x8x128xf32>,
    %cst_42 = arith.constant 428.932129 : f32
    %54 = vector.broadcast %cst_42 : f32 to vector<8x128xf32>
    %55 = arith.mulf %3, %54 : vector<8x128xf32>
    %56 = math.sin %55 : vector<8x128xf32>
    %c0_43 = arith.constant 0 : index
    %c5 = arith.constant 5 : index
    %c0_44 = arith.constant 0 : index
    %c0_45 = arith.constant 0 : index
    %57 = vector.load %arg2[%c0_43, %c5, %c0_44, %c0_45] : memref<2x6x8x128xf32, #tpu.memory_space<vmem>>, vector<1x1x8x128xf32>
    %58 = vector.shape_cast %57 : vector<1x1x8x128xf32> to vector<8x128xf32>
    %59 = vector.shape_cast %56 : vector<8x128xf32> to vector<1x1x8x128xf32>
    tpu.vector_store %arg2[%c0_43, %c5, %c0_44, %c0_45], %59 {strides = array<i32>} : memref<2x6x8x128xf32, #tpu.memory_space<vmem>>, vector<1x1x8x128xf32>,
    %60 = math.cos %55 : vector<8x128xf32>
    %c1_46 = arith.constant 1 : index
    %c5_47 = arith.constant 5 : index
    %c0_48 = arith.constant 0 : index
    %c0_49 = arith.constant 0 : index
    %61 = vector.load %arg2[%c1_46, %c5_47, %c0_48, %c0_49] : memref<2x6x8x128xf32, #tpu.memory_space<vmem>>, vector<1x1x8x128xf32>
    %62 = vector.shape_cast %61 : vector<1x1x8x128xf32> to vector<8x128xf32>
    %63 = vector.shape_cast %60 : vector<8x128xf32> to vector<1x1x8x128xf32>
    tpu.vector_store %arg2[%c1_46, %c5_47, %c0_48, %c0_49], %63 {strides = array<i32>} : memref<2x6x8x128xf32, #tpu.memory_space<vmem>>, vector<1x1x8x128xf32>,
    return
  }
  func.func @transform_0(%arg0: i32) -> (i32, i32) {
    %c0_i32 = arith.constant 0 : i32
    %c0_i32_0 = arith.constant 0 : i32
    return %c0_i32, %arg0 : i32, i32
  }
  func.func @transform_1(%arg0: i32) -> (i32, i32, i32, i32) {
    %c0_i32 = arith.constant 0 : i32
    %c0_i32_0 = arith.constant 0 : i32
    %c0_i32_1 = arith.constant 0 : i32
    %c0_i32_2 = arith.constant 0 : i32
    return %c0_i32, %c0_i32_0, %c0_i32_1, %arg0 : i32, i32, i32, i32
  }
}

</mosaic_0001>

<llo_original>
// kernel: tpu_custom_call.1
$region0: #{tpu_custom_call.1}
  #allocation0 [shape = 'u32[]', space=smem, size = 0x4, offset = 0x4, fixed_abs, tag = 'smem constant byte address 0x4 - core index']
  #allocation1 [shape = 'u32[144,128]{1,0:T(1,128)}', space=vmem, size = 0x12000, scoped, tag = 'internal scratch']
  %s0 = inlined_call_operand.hbm [shape: f32[8,128], index: 0, kind: input, shape index: {}]
  %s1 = inlined_call_operand.hbm [shape: f32[2,6,8,128], index: 1, kind: output, shape index: {}]
  %s2 = sld [smem:[#allocation0]]
  $region18: #{tpu_custom_call.1} parent=0
    _
  %s4 = ssub.s32 1, %s2
  %s5 = scalar_select 0, %s4, %s2
  $region1: #{tpu_custom_call.1} parent=0
    #allocation2 [shape = 'u8[4096]{0}', space=vmem, size = 0x1000, scoped, tag = 'input window, operand 0, single buffered']
    #allocation3 [shape = 's32[1]{0}', space=sflag, size = 0x4, scoped, tag = 'scoped memory for tpu_custom_call.1']
    #allocation4 [shape = 's32[1]{0}', space=sflag, size = 0x4, scoped, tag = 'scoped memory for tpu_custom_call.1']
    #allocation5 [shape = 'u8[49152]{0}', space=vmem, size = 0xc000, scoped, tag = 'output window, operand 0, single buffered']
    %6 = vsyncpa [#allocation3], 0
    %7 = vsyncpa [#allocation4], 0
    // Predicated region
    $region2: #{tpu_custom_call.1} parent=1 // pred_check
      _
    $region3: #{tpu_custom_call.1} parent=1 // pred_check_branch
      %9 = sbr.rel (0) target = $region5
    $region4: #{tpu_custom_call.1} parent=1 // pred_region
      %s11 = ssub.s32 128, 128
      %12 = vsyncadd [#allocation3], %s11
      %s14 = sshll.u32 [#allocation2], 4
      %s15 = int_to_ptr.vmem [resolvable:$true] %s14
      %17 = dma.hbm_to_vmem [thread:$0]  %s0, 128, %s15, [#allocation3]
    $region5: #{tpu_custom_call.1} parent=1 // pred_fallthru
      _
    // Predicated region
    $region6: #{tpu_custom_call.1} parent=1 // pred_check
      _
    $region7: #{tpu_custom_call.1} parent=1 // pred_check_branch
      %19 = sbr.rel (0) target = $region9
    $region8: #{tpu_custom_call.1} parent=1 // pred_region
      %20 = dma.done [#allocation3], 128
    $region9: #{tpu_custom_call.1} parent=1 // pred_fallthru
      _
    %v21 = vld [vmem:[#allocation2] sm:$0xff]
    %v22 = vadd.f32 %v21, 1e-08
    %v23 = vrsqrt.pop %v22
    %v24 = vmul.f32 %v22, %v23
    %vm25 = vcmp.eq.f32.partialorder %v22, inf
    %v26 = vsel %vm25, %v22, %v24
    %vm27 = vcmp.eq.f32.partialorder %v22, 0.0
    %v28 = vand.u32 %v22, 2147483648
    %v29 = vsel %vm27, %v28, %v26
    %v30 = vmul.f32 %v29, 0.41887903
    %v31 = vand.u32 2147483647, %v30
    %vm32 = vcmp.le.f32.partialorder %v31, 0.7853982
    %vm33 = vcmp.lt.s32.totalorder %v30, 0
    %v34 = vand.u32 %v30, 2139095040
    %v35 = vshrl.u32 %v34, 23
    %v36 = vsub.s32 %v35, 127
    %v37 = vand.u32 2147483647, %v30
    %v38 = vand.u32 %v37, 8388607
    %v39 = vor.u32 %v38, 8388608
    %v40 = vsub.s32 0, %v39
    %v41 = vadd.s32 %v36, 1
    %vm42 = vcmp.gt.s32.totalorder %v41, 0
    %v43 = vsel %vm42, %v41, 0
    %v44 = vshrl.u32 %v43, 5
    %v45 = vand.u32 %v43, 31
    %v46 = vsub.s32 32, %v45
    %v47 = vshrl.u32 683565275, %v46
    %v48 = vshll.u32 683565275, %v45
    %v49 = vshrl.u32 2475754826, %v46
    %v50 = vor.u32 %v48, %v49
    %v51 = vshll.u32 2475754826, %v45
    %v52 = vshrl.u32 2131351028, %v46
    %v53 = vor.u32 %v51, %v52
    %v54 = vshll.u32 2131351028, %v45
    %v55 = vshrl.u32 2102212464, %v46
    %v56 = vor.u32 %v54, %v55
    %v57 = vshll.u32 2102212464, %v45
    %v58 = vshrl.u32 920167782, %v46
    %v59 = vor.u32 %v57, %v58
    %v60 = vshll.u32 920167782, %v45
    %v61 = vshrl.u32 1326507024, %v46
    %v62 = vor.u32 %v60, %v61
    %vm63 = vcmp.lt.s32.totalorder %v44, 1
    %vm64 = vcmp.lt.s32.totalorder %v44, 2
    %vm65 = vcmp.lt.s32.totalorder %v44, 3
    %vm66 = vcmp.lt.s32.totalorder %v44, 4
    %v67 = vsel %vm63, %v47, %v50
    %v68 = vsel %vm66, %v56, 2102212464
    %v69 = vsel %vm65, %v53, %v68
    %v70 = vsel %vm64, %v67, %v69
    %v71 = vsel %vm63, %v50, %v53
    %v72 = vsel %vm66, %v59, 920167782
    %v73 = vsel %vm65, %v56, %v72
    %v74 = vsel %vm64, %v71, %v73
    %v75 = vsel %vm63, %v53, %v56
    %v76 = vsel %vm66, %v62, 1326507024
    %v77 = vsel %vm65, %v59, %v76
    %v78 = vsel %vm64, %v75, %v77
    %v79 = vshll.u32 %v39, 8
    %v80 = vmul.u32.u64.compose %v79, %v78
    %v81 = vextract.low.u32 %v80
    %v82 = vextract.high.u32 %v80
    %v83 = vmul.u32.u64.compose %v79, %v74
    %v84 = vextract.low.u32 %v83
    %v85 = vextract.high.u32 %v83
    %v86 = vmul.u32 %v79, %v70
    %v87 = vadd.s32 %v82, %v84
    %vm88 = vc.u32 %v82, %v84
    %v89 = vadd.s32 %v85, 1
    %v90 = vsel %vm88, %v89, %v85
    %v91 = vadd.s32 %v86, %v90
    %v92 = vadd.s32 %v91, 536870912
    %v93 = vshrl.u32 %v92, 30
    %v94 = vshll.u32 %v93, 30
    %v95 = vsub.s32 %v91, %v94
    %vm96 = vcmp.lt.s32.totalorder %v95, 0
    %v97 = vsub.s32 0, %v95
    %v98 = vsel %vm96, %v97, %v95
    %v99 = vclz %v98
    %v100 = vsub.s32 %v99, 2
    %vm101 = vcmp.gt.s32.totalorder 0, %v100
    %v102 = vsel %vm101, 0, %v100
    %v103 = vsub.s32 32, %v102
    %v104 = vshll.u32 %v95, %v102
    %v105 = vshrl.u32 %v87, %v103
    %v106 = vor.u32 %v104, %v105
    %v107 = vsub.s32 4294967266, %v102
    %v108 = vadd.s32 %v107, 127
    %v109 = vshll.u32 %v108, 23
    %v110 = vor.u32 4788187, %v109
    %v111 = vand.u32 2147483647, %v110
    %v113 = vcvt.s32.f32 %v106
    %v114 = vmul.f32 %v113, %v111
    %v115 = vxor.u32 %v114, 2147483648
    %v116 = vsel %vm33, %v115, %v114
    %v117 = vsub.s32 4, %v93
    %v118 = vsel %vm33, %v117, %v93
    %v119 = vsel %vm32, %v30, %v116
    %v120 = vsel %vm32, 0, %v118
    %v121 = vcosq.f32.pop %v119
    %v122 = vsinq.f32.pop %v119
    %vm123 = vweird.f32 %v30
    %v124 = vadd.s32 %v120, 3
    %v125 = vand.u32 %v124, 3
    %vm126 = vcmp.lt.s32.totalorder %v125, 2
    %vm127 = vcmp.eq.s32.totalorder %v125, 0
    %v128 = vxor.u32 %v122, 2147483648
    %v129 = vsel %vm127, %v121, %v128
    %vm130 = vcmp.eq.s32.totalorder %v125, 2
    %v131 = vxor.u32 %v121, 2147483648
    %v132 = vsel %vm130, %v131, %v122
    %v133 = vsel %vm126, %v129, %v132
    %v134 = vsel %vm123, nan, %v133
    %135 = vst [vmem:[#allocation5] sm:$0xff] %v134
    %v136 = vand.u32 2147483647, %v30
    %vm137 = vcmp.le.f32.partialorder %v136, 0.7853982
    %vm138 = vcmp.lt.s32.totalorder %v30, 0
    %v139 = vand.u32 %v30, 2139095040
    %v140 = vshrl.u32 %v139, 23
    %v141 = vsub.s32 %v140, 127
    %v142 = vand.u32 2147483647, %v30
    %v143 = vand.u32 %v142, 8388607
    %v144 = vor.u32 %v143, 8388608
    %v145 = vsub.s32 0, %v144
    %v146 = vadd.s32 %v141, 1
    %vm147 = vcmp.gt.s32.totalorder %v146, 0
    %v148 = vsel %vm147, %v146, 0
    %v149 = vshrl.u32 %v148, 5
    %v150 = vand.u32 %v148, 31
    %v151 = vsub.s32 32, %v150
    %v152 = vshrl.u32 683565275, %v151
    %v153 = vshll.u32 683565275, %v150
    %v154 = vshrl.u32 2475754826, %v151
    %v155 = vor.u32 %v153, %v154
    %v156 = vshll.u32 2475754826, %v150
    %v157 = vshrl.u32 2131351028, %v151
    %v158 = vor.u32 %v156, %v157
    %v159 = vshll.u32 2131351028, %v150
    %v160 = vshrl.u32 2102212464, %v151
    %v161 = vor.u32 %v159, %v160
    %v162 = vshll.u32 2102212464, %v150
    %v163 = vshrl.u32 920167782, %v151
    %v164 = vor.u32 %v162, %v163
    %v165 = vshll.u32 920167782, %v150
    %v166 = vshrl.u32 1326507024, %v151
    %v167 = vor.u32 %v165, %v166
    %vm168 = vcmp.lt.s32.totalorder %v149, 1
    %vm169 = vcmp.lt.s32.totalorder %v149, 2
    %vm170 = vcmp.lt.s32.totalorder %v149, 3
    %vm171 = vcmp.lt.s32.totalorder %v149, 4
    %v172 = vsel %vm168, %v152, %v155
    %v173 = vsel %vm171, %v161, 2102212464
    %v174 = vsel %vm170, %v158, %v173
    %v175 = vsel %vm169, %v172, %v174
    %v176 = vsel %vm168, %v155, %v158
    %v177 = vsel %vm171, %v164, 920167782
    %v178 = vsel %vm170, %v161, %v177
    %v179 = vsel %vm169, %v176, %v178
    %v180 = vsel %vm168, %v158, %v161
    %v181 = vsel %vm171, %v167, 1326507024
    %v182 = vsel %vm170, %v164, %v181
    %v183 = vsel %vm169, %v180, %v182
    %v184 = vshll.u32 %v144, 8
    %v185 = vmul.u32.u64.compose %v184, %v183
    %v186 = vextract.low.u32 %v185
    %v187 = vextract.high.u32 %v185
    %v188 = vmul.u32.u64.compose %v184, %v179
    %v189 = vextract.low.u32 %v188
    %v190 = vextract.high.u32 %v188
    %v191 = vmul.u32 %v184, %v175
    %v192 = vadd.s32 %v187, %v189
    %vm193 = vc.u32 %v187, %v189
    %v194 = vadd.s32 %v190, 1
    %v195 = vsel %vm193, %v194, %v190
    %v196 = vadd.s32 %v191, %v195
    %v197 = vadd.s32 %v196, 536870912
    %v198 = vshrl.u32 %v197, 30
    %v199 = vshll.u32 %v198, 30
    %v200 = vsub.s32 %v196, %v199
    %vm201 = vcmp.lt.s32.totalorder %v200, 0
    %v202 = vsub.s32 0, %v200
    %v203 = vsel %vm201, %v202, %v200
    %v204 = vclz %v203
    %v205 = vsub.s32 %v204, 2
    %vm206 = vcmp.gt.s32.totalorder 0, %v205
    %v207 = vsel %vm206, 0, %v205
    %v208 = vsub.s32 32, %v207
    %v209 = vshll.u32 %v200, %v207
    %v210 = vshrl.u32 %v192, %v208
    %v211 = vor.u32 %v209, %v210
    %v212 = vsub.s32 4294967266, %v207
    %v213 = vadd.s32 %v212, 127
    %v214 = vshll.u32 %v213, 23
    %v215 = vor.u32 4788187, %v214
    %v216 = vand.u32 2147483647, %v215
    %v218 = vcvt.s32.f32 %v211
    %v219 = vmul.f32 %v218, %v216
    %v220 = vxor.u32 %v219, 2147483648
    %v221 = vsel %vm138, %v220, %v219
    %v222 = vsub.s32 4, %v198
    %v223 = vsel %vm138, %v222, %v198
    %v224 = vsel %vm137, %v30, %v221
    %v225 = vsel %vm137, 0, %v223
    %v226 = vcosq.f32.pop %v224
    %v227 = vsinq.f32.pop %v224
    %vm228 = vweird.f32 %v30
    %v229 = vand.u32 %v225, 3
    %vm230 = vcmp.lt.s32.totalorder %v229, 2
    %vm231 = vcmp.eq.s32.totalorder %v229, 0
    %v232 = vxor.u32 %v227, 2147483648
    %v233 = vsel %vm231, %v226, %v232
    %vm234 = vcmp.eq.s32.totalorder %v229, 2
    %v235 = vxor.u32 %v226, 2147483648
    %v236 = vsel %vm234, %v235, %v227
    %v237 = vsel %vm230, %v233, %v236
    %v238 = vsel %vm228, nan, %v237
    %s239 = scalar_lea.vmem [#allocation5], 48
    %240 = vst [vmem:[%s239] sm:$0xff] %v238
    %v241 = vmul.f32 %v29, 1.6755161
    %v242 = vand.u32 2147483647, %v241
    %vm243 = vcmp.le.f32.partialorder %v242, 0.7853982
    %vm244 = vcmp.lt.s32.totalorder %v241, 0
    %v245 = vand.u32 %v241, 2139095040
    %v246 = vshrl.u32 %v245, 23
    %v247 = vsub.s32 %v246, 127
    %v248 = vand.u32 2147483647, %v241
    %v249 = vand.u32 %v248, 8388607
    %v250 = vor.u32 %v249, 8388608
    %v251 = vsub.s32 0, %v250
    %v252 = vadd.s32 %v247, 1
    %vm253 = vcmp.gt.s32.totalorder %v252, 0
    %v254 = vsel %vm253, %v252, 0
    %v255 = vshrl.u32 %v254, 5
    %v256 = vand.u32 %v254, 31
    %v257 = vsub.s32 32, %v256
    %v258 = vshrl.u32 683565275, %v257
    %v259 = vshll.u32 683565275, %v256
    %v260 = vshrl.u32 2475754826, %v257
    %v261 = vor.u32 %v259, %v260
    %v262 = vshll.u32 2475754826, %v256
    %v263 = vshrl.u32 2131351028, %v257
    %v264 = vor.u32 %v262, %v263
    %v265 = vshll.u32 2131351028, %v256
    %v266 = vshrl.u32 2102212464, %v257
    %v267 = vor.u32 %v265, %v266
    %v268 = vshll.u32 2102212464, %v256
    %v269 = vshrl.u32 920167782, %v257
    %v270 = vor.u32 %v268, %v269
    %v271 = vshll.u32 920167782, %v256
    %v272 = vshrl.u32 1326507024, %v257
    %v273 = vor.u32 %v271, %v272
    %vm274 = vcmp.lt.s32.totalorder %v255, 1
    %vm275 = vcmp.lt.s32.totalorder %v255, 2
    %vm276 = vcmp.lt.s32.totalorder %v255, 3
    %vm277 = vcmp.lt.s32.totalorder %v255, 4
    %v278 = vsel %vm274, %v258, %v261
    %v279 = vsel %vm277, %v267, 2102212464
    %v280 = vsel %vm276, %v264, %v279
    %v281 = vsel %vm275, %v278, %v280
    %v282 = vsel %vm274, %v261, %v264
    %v283 = vsel %vm277, %v270, 920167782
    %v284 = vsel %vm276, %v267, %v283
    %v285 = vsel %vm275, %v282, %v284
    %v286 = vsel %vm274, %v264, %v267
    %v287 = vsel %vm277, %v273, 1326507024
    %v288 = vsel %vm276, %v270, %v287
    %v289 = vsel %vm275, %v286, %v288
    %v290 = vshll.u32 %v250, 8
    %v291 = vmul.u32.u64.compose %v290, %v289
    %v292 = vextract.low.u32 %v291
    %v293 = vextract.high.u32 %v291
    %v294 = vmul.u32.u64.compose %v290, %v285
    %v295 = vextract.low.u32 %v294
    %v296 = vextract.high.u32 %v294
    %v297 = vmul.u32 %v290, %v281
    %v298 = vadd.s32 %v293, %v295
    %vm299 = vc.u32 %v293, %v295
    %v300 = vadd.s32 %v296, 1
    %v301 = vsel %vm299, %v300, %v296
    %v302 = vadd.s32 %v297, %v301
    %v303 = vadd.s32 %v302, 536870912
    %v304 = vshrl.u32 %v303, 30
    %v305 = vshll.u32 %v304, 30
    %v306 = vsub.s32 %v302, %v305
    %vm307 = vcmp.lt.s32.totalorder %v306, 0
    %v308 = vsub.s32 0, %v306
    %v309 = vsel %vm307, %v308, %v306
    %v310 = vclz %v309
    %v311 = vsub.s32 %v310, 2
    %vm312 = vcmp.gt.s32.totalorder 0, %v311
    %v313 = vsel %vm312, 0, %v311
    %v314 = vsub.s32 32, %v313
    %v315 = vshll.u32 %v306, %v313
    %v316 = vshrl.u32 %v298, %v314
    %v317 = vor.u32 %v315, %v316
    %v318 = vsub.s32 4294967266, %v313
    %v319 = vadd.s32 %v318, 127
    %v320 = vshll.u32 %v319, 23
    %v321 = vor.u32 4788187, %v320
    %v322 = vand.u32 2147483647, %v321
    %v324 = vcvt.s32.f32 %v317
    %v325 = vmul.f32 %v324, %v322
    %v326 = vxor.u32 %v325, 2147483648
    %v327 = vsel %vm244, %v326, %v325
    %v328 = vsub.s32 4, %v304
    %v329 = vsel %vm244, %v328, %v304
    %v330 = vsel %vm243, %v241, %v327
    %v331 = vsel %vm243, 0, %v329
    %v332 = vcosq.f32.pop %v330
    %v333 = vsinq.f32.pop %v330
    %vm334 = vweird.f32 %v241
    %v335 = vadd.s32 %v331, 3
    %v336 = vand.u32 %v335, 3
    %vm337 = vcmp.lt.s32.totalorder %v336, 2
    %vm338 = vcmp.eq.s32.totalorder %v336, 0
    %v339 = vxor.u32 %v333, 2147483648
    %v340 = vsel %vm338, %v332, %v339
    %vm341 = vcmp.eq.s32.totalorder %v336, 2
    %v342 = vxor.u32 %v332, 2147483648
    %v343 = vsel %vm341, %v342, %v333
    %v344 = vsel %vm337, %v340, %v343
    %v345 = vsel %vm334, nan, %v344
    %s346 = scalar_lea.vmem [#allocation5], 8
    %347 = vst [vmem:[%s346] sm:$0xff] %v345
    %v348 = vand.u32 2147483647, %v241
    %vm349 = vcmp.le.f32.partialorder %v348, 0.7853982
    %vm350 = vcmp.lt.s32.totalorder %v241, 0
    %v351 = vand.u32 %v241, 2139095040
    %v352 = vshrl.u32 %v351, 23
    %v353 = vsub.s32 %v352, 127
    %v354 = vand.u32 2147483647, %v241
    %v355 = vand.u32 %v354, 8388607
    %v356 = vor.u32 %v355, 8388608
    %v357 = vsub.s32 0, %v356
    %v358 = vadd.s32 %v353, 1
    %vm359 = vcmp.gt.s32.totalorder %v358, 0
    %v360 = vsel %vm359, %v358, 0
    %v361 = vshrl.u32 %v360, 5
    %v362 = vand.u32 %v360, 31
    %v363 = vsub.s32 32, %v362
    %v364 = vshrl.u32 683565275, %v363
    %v365 = vshll.u32 683565275, %v362
    %v366 = vshrl.u32 2475754826, %v363
    %v367 = vor.u32 %v365, %v366
    %v368 = vshll.u32 2475754826, %v362
    %v369 = vshrl.u32 2131351028, %v363
    %v370 = vor.u32 %v368, %v369
    %v371 = vshll.u32 2131351028, %v362
    %v372 = vshrl.u32 2102212464, %v363
    %v373 = vor.u32 %v371, %v372
    %v374 = vshll.u32 2102212464, %v362
    %v375 = vshrl.u32 920167782, %v363
    %v376 = vor.u32 %v374, %v375
    %v377 = vshll.u32 920167782, %v362
    %v378 = vshrl.u32 1326507024, %v363
    %v379 = vor.u32 %v377, %v378
    %vm380 = vcmp.lt.s32.totalorder %v361, 1
    %vm381 = vcmp.lt.s32.totalorder %v361, 2
    %vm382 = vcmp.lt.s32.totalorder %v361, 3
    %vm383 = vcmp.lt.s32.totalorder %v361, 4
    %v384 = vsel %vm380, %v364, %v367
    %v385 = vsel %vm383, %v373, 2102212464
    %v386 = vsel %vm382, %v370, %v385
    %v387 = vsel %vm381, %v384, %v386
    %v388 = vsel %vm380, %v367, %v370
    %v389 = vsel %vm383, %v376, 920167782
    %v390 = vsel %vm382, %v373, %v389
    %v391 = vsel %vm381, %v388, %v390
    %v392 = vsel %vm380, %v370, %v373
    %v393 = vsel %vm383, %v379, 1326507024
    %v394 = vsel %vm382, %v376, %v393
    %v395 = vsel %vm381, %v392, %v394
    %v396 = vshll.u32 %v356, 8
    %v397 = vmul.u32.u64.compose %v396, %v395
    %v398 = vextract.low.u32 %v397
    %v399 = vextract.high.u32 %v397
    %v400 = vmul.u32.u64.compose %v396, %v391
    %v401 = vextract.low.u32 %v400
    %v402 = vextract.high.u32 %v400
    %v403 = vmul.u32 %v396, %v387
    %v404 = vadd.s32 %v399, %v401
    %vm405 = vc.u32 %v399, %v401
    %v406 = vadd.s32 %v402, 1
    %v407 = vsel %vm405, %v406, %v402
    %v408 = vadd.s32 %v403, %v407
    %v409 = vadd.s32 %v408, 536870912
    %v410 = vshrl.u32 %v409, 30
    %v411 = vshll.u32 %v410, 30
    %v412 = vsub.s32 %v408, %v411
    %vm413 = vcmp.lt.s32.totalorder %v412, 0
    %v414 = vsub.s32 0, %v412
    %v415 = vsel %vm413, %v414, %v412
    %v416 = vclz %v415
    %v417 = vsub.s32 %v416, 2
    %vm418 = vcmp.gt.s32.totalorder 0, %v417
    %v419 = vsel %vm418, 0, %v417
    %v420 = vsub.s32 32, %v419
    %v421 = vshll.u32 %v412, %v419
    %v422 = vshrl.u32 %v404, %v420
    %v423 = vor.u32 %v421, %v422
    %v424 = vsub.s32 4294967266, %v419
    %v425 = vadd.s32 %v424, 127
    %v426 = vshll.u32 %v425, 23
    %v427 = vor.u32 4788187, %v426
    %v428 = vand.u32 2147483647, %v427
    %v430 = vcvt.s32.f32 %v423
    %v431 = vmul.f32 %v430, %v428
    %v432 = vxor.u32 %v431, 2147483648
    %v433 = vsel %vm350, %v432, %v431
    %v434 = vsub.s32 4, %v410
    %v435 = vsel %vm350, %v434, %v410
    %v436 = vsel %vm349, %v241, %v433
    %v437 = vsel %vm349, 0, %v435
    %v438 = vcosq.f32.pop %v436
    %v439 = vsinq.f32.pop %v436
    %vm440 = vweird.f32 %v241
    %v441 = vand.u32 %v437, 3
    %vm442 = vcmp.lt.s32.totalorder %v441, 2
    %vm443 = vcmp.eq.s32.totalorder %v441, 0
    %v444 = vxor.u32 %v439, 2147483648
    %v445 = vsel %vm443, %v438, %v444
    %vm446 = vcmp.eq.s32.totalorder %v441, 2
    %v447 = vxor.u32 %v438, 2147483648
    %v448 = vsel %vm446, %v447, %v439
    %v449 = vsel %vm442, %v445, %v448
    %v450 = vsel %vm440, nan, %v449
    %s451 = scalar_lea.vmem [#allocation5], 56
    %452 = vst [vmem:[%s451] sm:$0xff] %v450
    %v453 = vmul.f32 %v29, 6.7020645
    %v454 = vand.u32 2147483647, %v453
    %vm455 = vcmp.le.f32.partialorder %v454, 0.7853982
    %vm456 = vcmp.lt.s32.totalorder %v453, 0
    %v457 = vand.u32 %v453, 2139095040
    %v458 = vshrl.u32 %v457, 23
    %v459 = vsub.s32 %v458, 127
    %v460 = vand.u32 2147483647, %v453
    %v461 = vand.u32 %v460, 8388607
    %v462 = vor.u32 %v461, 8388608
    %v463 = vsub.s32 0, %v462
    %v464 = vadd.s32 %v459, 1
    %vm465 = vcmp.gt.s32.totalorder %v464, 0
    %v466 = vsel %vm465, %v464, 0
    %v467 = vshrl.u32 %v466, 5
    %v468 = vand.u32 %v466, 31
    %v469 = vsub.s32 32, %v468
    %v470 = vshrl.u32 683565275, %v469
    %v471 = vshll.u32 683565275, %v468
    %v472 = vshrl.u32 2475754826, %v469
    %v473 = vor.u32 %v471, %v472
    %v474 = vshll.u32 2475754826, %v468
    %v475 = vshrl.u32 2131351028, %v469
    %v476 = vor.u32 %v474, %v475
    %v477 = vshll.u32 2131351028, %v468
    %v478 = vshrl.u32 2102212464, %v469
    %v479 = vor.u32 %v477, %v478
    %v480 = vshll.u32 2102212464, %v468
    %v481 = vshrl.u32 920167782, %v469
    %v482 = vor.u32 %v480, %v481
    %v483 = vshll.u32 920167782, %v468
    %v484 = vshrl.u32 1326507024, %v469
    %v485 = vor.u32 %v483, %v484
    %vm486 = vcmp.lt.s32.totalorder %v467, 1
    %vm487 = vcmp.lt.s32.totalorder %v467, 2
    %vm488 = vcmp.lt.s32.totalorder %v467, 3
    %vm489 = vcmp.lt.s32.totalorder %v467, 4
    %v490 = vsel %vm486, %v470, %v473
    %v491 = vsel %vm489, %v479, 2102212464
    %v492 = vsel %vm488, %v476, %v491
    %v493 = vsel %vm487, %v490, %v492
    %v494 = vsel %vm486, %v473, %v476
    %v495 = vsel %vm489, %v482, 920167782
    %v496 = vsel %vm488, %v479, %v495
    %v497 = vsel %vm487, %v494, %v496
    %v498 = vsel %vm486, %v476, %v479
    %v499 = vsel %vm489, %v485, 1326507024
    %v500 = vsel %vm488, %v482, %v499
    %v501 = vsel %vm487, %v498, %v500
    %v502 = vshll.u32 %v462, 8
    %v503 = vmul.u32.u64.compose %v502, %v501
    %v504 = vextract.low.u32 %v503
    %v505 = vextract.high.u32 %v503
    %v506 = vmul.u32.u64.compose %v502, %v497
    %v507 = vextract.low.u32 %v506
    %v508 = vextract.high.u32 %v506
    %v509 = vmul.u32 %v502, %v493
    %v510 = vadd.s32 %v505, %v507
    %vm511 = vc.u32 %v505, %v507
    %v512 = vadd.s32 %v508, 1
    %v513 = vsel %vm511, %v512, %v508
    %v514 = vadd.s32 %v509, %v513
    %v515 = vadd.s32 %v514, 536870912
    %v516 = vshrl.u32 %v515, 30
    %v517 = vshll.u32 %v516, 30
    %v518 = vsub.s32 %v514, %v517
    %vm519 = vcmp.lt.s32.totalorder %v518, 0
    %v520 = vsub.s32 0, %v518
    %v521 = vsel %vm519, %v520, %v518
    %v522 = vclz %v521
    %v523 = vsub.s32 %v522, 2
    %vm524 = vcmp.gt.s32.totalorder 0, %v523
    %v525 = vsel %vm524, 0, %v523
    %v526 = vsub.s32 32, %v525
    %v527 = vshll.u32 %v518, %v525
    %v528 = vshrl.u32 %v510, %v526
    %v529 = vor.u32 %v527, %v528
    %v530 = vsub.s32 4294967266, %v525
    %v531 = vadd.s32 %v530, 127
    %v532 = vshll.u32 %v531, 23
    %v533 = vor.u32 4788187, %v532
    %v534 = vand.u32 2147483647, %v533
    %v536 = vcvt.s32.f32 %v529
    %v537 = vmul.f32 %v536, %v534
    %v538 = vxor.u32 %v537, 2147483648
    %v539 = vsel %vm456, %v538, %v537
    %v540 = vsub.s32 4, %v516
    %v541 = vsel %vm456, %v540, %v516
    %v542 = vsel %vm455, %v453, %v539
    %v543 = vsel %vm455, 0, %v541
    %v544 = vcosq.f32.pop %v542
    %v545 = vsinq.f32.pop %v542
    %vm546 = vweird.f32 %v453
    %v547 = vadd.s32 %v543, 3
    %v548 = vand.u32 %v547, 3
    %vm549 = vcmp.lt.s32.totalorder %v548, 2
    %vm550 = vcmp.eq.s32.totalorder %v548, 0
    %v551 = vxor.u32 %v545, 2147483648
    %v552 = vsel %vm550, %v544, %v551
    %vm553 = vcmp.eq.s32.totalorder %v548, 2
    %v554 = vxor.u32 %v544, 2147483648
    %v555 = vsel %vm553, %v554, %v545
    %v556 = vsel %vm549, %v552, %v555
    %v557 = vsel %vm546, nan, %v556
    %s558 = scalar_lea.vmem [#allocation5], 16
    %559 = vst [vmem:[%s558] sm:$0xff] %v557
    %v560 = vand.u32 2147483647, %v453
    %vm561 = vcmp.le.f32.partialorder %v560, 0.7853982
    %vm562 = vcmp.lt.s32.totalorder %v453, 0
    %v563 = vand.u32 %v453, 2139095040
    %v564 = vshrl.u32 %v563, 23
    %v565 = vsub.s32 %v564, 127
    %v566 = vand.u32 2147483647, %v453
    %v567 = vand.u32 %v566, 8388607
    %v568 = vor.u32 %v567, 8388608
    %v569 = vsub.s32 0, %v568
    %v570 = vadd.s32 %v565, 1
    %vm571 = vcmp.gt.s32.totalorder %v570, 0
    %v572 = vsel %vm571, %v570, 0
    %v573 = vshrl.u32 %v572, 5
    %v574 = vand.u32 %v572, 31
    %v575 = vsub.s32 32, %v574
    %v576 = vshrl.u32 683565275, %v575
    %v577 = vshll.u32 683565275, %v574
    %v578 = vshrl.u32 2475754826, %v575
    %v579 = vor.u32 %v577, %v578
    %v580 = vshll.u32 2475754826, %v574
    %v581 = vshrl.u32 2131351028, %v575
    %v582 = vor.u32 %v580, %v581
    %v583 = vshll.u32 2131351028, %v574
    %v584 = vshrl.u32 2102212464, %v575
    %v585 = vor.u32 %v583, %v584
    %v586 = vshll.u32 2102212464, %v574
    %v587 = vshrl.u32 920167782, %v575
    %v588 = vor.u32 %v586, %v587
    %v589 = vshll.u32 920167782, %v574
    %v590 = vshrl.u32 1326507024, %v575
    %v591 = vor.u32 %v589, %v590
    %vm592 = vcmp.lt.s32.totalorder %v573, 1
    %vm593 = vcmp.lt.s32.totalorder %v573, 2
    %vm594 = vcmp.lt.s32.totalorder %v573, 3
    %vm595 = vcmp.lt.s32.totalorder %v573, 4
    %v596 = vsel %vm592, %v576, %v579
    %v597 = vsel %vm595, %v585, 2102212464
    %v598 = vsel %vm594, %v582, %v597
    %v599 = vsel %vm593, %v596, %v598
    %v600 = vsel %vm592, %v579, %v582
    %v601 = vsel %vm595, %v588, 920167782
    %v602 = vsel %vm594, %v585, %v601
    %v603 = vsel %vm593, %v600, %v602
    %v604 = vsel %vm592, %v582, %v585
    %v605 = vsel %vm595, %v591, 1326507024
    %v606 = vsel %vm594, %v588, %v605
    %v607 = vsel %vm593, %v604, %v606
    %v608 = vshll.u32 %v568, 8
    %v609 = vmul.u32.u64.compose %v608, %v607
    %v610 = vextract.low.u32 %v609
    %v611 = vextract.high.u32 %v609
    %v612 = vmul.u32.u64.compose %v608, %v603
    %v613 = vextract.low.u32 %v612
    %v614 = vextract.high.u32 %v612
    %v615 = vmul.u32 %v608, %v599
    %v616 = vadd.s32 %v611, %v613
    %vm617 = vc.u32 %v611, %v613
    %v618 = vadd.s32 %v614, 1
    %v619 = vsel %vm617, %v618, %v614
    %v620 = vadd.s32 %v615, %v619
    %v621 = vadd.s32 %v620, 536870912
    %v622 = vshrl.u32 %v621, 30
    %v623 = vshll.u32 %v622, 30
    %v624 = vsub.s32 %v620, %v623
    %vm625 = vcmp.lt.s32.totalorder %v624, 0
    %v626 = vsub.s32 0, %v624
    %v627 = vsel %vm625, %v626, %v624
    %v628 = vclz %v627
    %v629 = vsub.s32 %v628, 2
    %vm630 = vcmp.gt.s32.totalorder 0, %v629
    %v631 = vsel %vm630, 0, %v629
    %v632 = vsub.s32 32, %v631
    %v633 = vshll.u32 %v624, %v631
    %v634 = vshrl.u32 %v616, %v632
    %v635 = vor.u32 %v633, %v634
    %v636 = vsub.s32 4294967266, %v631
    %v637 = vadd.s32 %v636, 127
    %v638 = vshll.u32 %v637, 23
    %v639 = vor.u32 4788187, %v638
    %v640 = vand.u32 2147483647, %v639
    %v642 = vcvt.s32.f32 %v635
    %v643 = vmul.f32 %v642, %v640
    %v644 = vxor.u32 %v643, 2147483648
    %v645 = vsel %vm562, %v644, %v643
    %v646 = vsub.s32 4, %v622
    %v647 = vsel %vm562, %v646, %v622
    %v648 = vsel %vm561, %v453, %v645
    %v649 = vsel %vm561, 0, %v647
    %v650 = vcosq.f32.pop %v648
    %v651 = vsinq.f32.pop %v648
    %vm652 = vweird.f32 %v453
    %v653 = vand.u32 %v649, 3
    %vm654 = vcmp.lt.s32.totalorder %v653, 2
    %vm655 = vcmp.eq.s32.totalorder %v653, 0
    %v656 = vxor.u32 %v651, 2147483648
    %v657 = vsel %vm655, %v650, %v656
    %vm658 = vcmp.eq.s32.totalorder %v653, 2
    %v659 = vxor.u32 %v650, 2147483648
    %v660 = vsel %vm658, %v659, %v651
    %v661 = vsel %vm654, %v657, %v660
    %v662 = vsel %vm652, nan, %v661
    %s663 = scalar_lea.vmem [#allocation5], 64
    %664 = vst [vmem:[%s663] sm:$0xff] %v662
    %v665 = vmul.f32 %v29, 26.808258
    %v666 = vand.u32 2147483647, %v665
    %vm667 = vcmp.le.f32.partialorder %v666, 0.7853982
    %vm668 = vcmp.lt.s32.totalorder %v665, 0
    %v669 = vand.u32 %v665, 2139095040
    %v670 = vshrl.u32 %v669, 23
    %v671 = vsub.s32 %v670, 127
    %v672 = vand.u32 2147483647, %v665
    %v673 = vand.u32 %v672, 8388607
    %v674 = vor.u32 %v673, 8388608
    %v675 = vsub.s32 0, %v674
    %v676 = vadd.s32 %v671, 1
    %vm677 = vcmp.gt.s32.totalorder %v676, 0
    %v678 = vsel %vm677, %v676, 0
    %v679 = vshrl.u32 %v678, 5
    %v680 = vand.u32 %v678, 31
    %v681 = vsub.s32 32, %v680
    %v682 = vshrl.u32 683565275, %v681
    %v683 = vshll.u32 683565275, %v680
    %v684 = vshrl.u32 2475754826, %v681
    %v685 = vor.u32 %v683, %v684
    %v686 = vshll.u32 2475754826, %v680
    %v687 = vshrl.u32 2131351028, %v681
    %v688 = vor.u32 %v686, %v687
    %v689 = vshll.u32 2131351028, %v680
    %v690 = vshrl.u32 2102212464, %v681
    %v691 = vor.u32 %v689, %v690
    %v692 = vshll.u32 2102212464, %v680
    %v693 = vshrl.u32 920167782, %v681
    %v694 = vor.u32 %v692, %v693
    %v695 = vshll.u32 920167782, %v680
    %v696 = vshrl.u32 1326507024, %v681
    %v697 = vor.u32 %v695, %v696
    %vm698 = vcmp.lt.s32.totalorder %v679, 1
    %vm699 = vcmp.lt.s32.totalorder %v679, 2
    %vm700 = vcmp.lt.s32.totalorder %v679, 3
    %vm701 = vcmp.lt.s32.totalorder %v679, 4
    %v702 = vsel %vm698, %v682, %v685
    %v703 = vsel %vm701, %v691, 2102212464
    %v704 = vsel %vm700, %v688, %v703
    %v705 = vsel %vm699, %v702, %v704
    %v706 = vsel %vm698, %v685, %v688
    %v707 = vsel %vm701, %v694, 920167782
    %v708 = vsel %vm700, %v691, %v707
    %v709 = vsel %vm699, %v706, %v708
    %v710 = vsel %vm698, %v688, %v691
    %v711 = vsel %vm701, %v697, 1326507024
    %v712 = vsel %vm700, %v694, %v711
    %v713 = vsel %vm699, %v710, %v712
    %v714 = vshll.u32 %v674, 8
    %v715 = vmul.u32.u64.compose %v714, %v713
    %v716 = vextract.low.u32 %v715
    %v717 = vextract.high.u32 %v715
    %v718 = vmul.u32.u64.compose %v714, %v709
    %v719 = vextract.low.u32 %v718
    %v720 = vextract.high.u32 %v718
    %v721 = vmul.u32 %v714, %v705
    %v722 = vadd.s32 %v717, %v719
    %vm723 = vc.u32 %v717, %v719
    %v724 = vadd.s32 %v720, 1
    %v725 = vsel %vm723, %v724, %v720
    %v726 = vadd.s32 %v721, %v725
    %v727 = vadd.s32 %v726, 536870912
    %v728 = vshrl.u32 %v727, 30
    %v729 = vshll.u32 %v728, 30
    %v730 = vsub.s32 %v726, %v729
    %vm731 = vcmp.lt.s32.totalorder %v730, 0
    %v732 = vsub.s32 0, %v730
    %v733 = vsel %vm731, %v732, %v730
    %v734 = vclz %v733
    %v735 = vsub.s32 %v734, 2
    %vm736 = vcmp.gt.s32.totalorder 0, %v735
    %v737 = vsel %vm736, 0, %v735
    %v738 = vsub.s32 32, %v737
    %v739 = vshll.u32 %v730, %v737
    %v740 = vshrl.u32 %v722, %v738
    %v741 = vor.u32 %v739, %v740
    %v742 = vsub.s32 4294967266, %v737
    %v743 = vadd.s32 %v742, 127
    %v744 = vshll.u32 %v743, 23
    %v745 = vor.u32 4788187, %v744
    %v746 = vand.u32 2147483647, %v745
    %v748 = vcvt.s32.f32 %v741
    %v749 = vmul.f32 %v748, %v746
    %v750 = vxor.u32 %v749, 2147483648
    %v751 = vsel %vm668, %v750, %v749
    %v752 = vsub.s32 4, %v728
    %v753 = vsel %vm668, %v752, %v728
    %v754 = vsel %vm667, %v665, %v751
    %v755 = vsel %vm667, 0, %v753
    %v756 = vcosq.f32.pop %v754
    %v757 = vsinq.f32.pop %v754
    %vm758 = vweird.f32 %v665
    %v759 = vadd.s32 %v755, 3
    %v760 = vand.u32 %v759, 3
    %vm761 = vcmp.lt.s32.totalorder %v760, 2
    %vm762 = vcmp.eq.s32.totalorder %v760, 0
    %v763 = vxor.u32 %v757, 2147483648
    %v764 = vsel %vm762, %v756, %v763
    %vm765 = vcmp.eq.s32.totalorder %v760, 2
    %v766 = vxor.u32 %v756, 2147483648
    %v767 = vsel %vm765, %v766, %v757
    %v768 = vsel %vm761, %v764, %v767
    %v769 = vsel %vm758, nan, %v768
    %s770 = scalar_lea.vmem [#allocation5], 24
    %771 = vst [vmem:[%s770] sm:$0xff] %v769
    %v772 = vand.u32 2147483647, %v665
    %vm773 = vcmp.le.f32.partialorder %v772, 0.7853982
    %vm774 = vcmp.lt.s32.totalorder %v665, 0
    %v775 = vand.u32 %v665, 2139095040
    %v776 = vshrl.u32 %v775, 23
    %v777 = vsub.s32 %v776, 127
    %v778 = vand.u32 2147483647, %v665
    %v779 = vand.u32 %v778, 8388607
    %v780 = vor.u32 %v779, 8388608
    %v781 = vsub.s32 0, %v780
    %v782 = vadd.s32 %v777, 1
    %vm783 = vcmp.gt.s32.totalorder %v782, 0
    %v784 = vsel %vm783, %v782, 0
    %v785 = vshrl.u32 %v784, 5
    %v786 = vand.u32 %v784, 31
    %v787 = vsub.s32 32, %v786
    %v788 = vshrl.u32 683565275, %v787
    %v789 = vshll.u32 683565275, %v786
    %v790 = vshrl.u32 2475754826, %v787
    %v791 = vor.u32 %v789, %v790
    %v792 = vshll.u32 2475754826, %v786
    %v793 = vshrl.u32 2131351028, %v787
    %v794 = vor.u32 %v792, %v793
    %v795 = vshll.u32 2131351028, %v786
    %v796 = vshrl.u32 2102212464, %v787
    %v797 = vor.u32 %v795, %v796
    %v798 = vshll.u32 2102212464, %v786
    %v799 = vshrl.u32 920167782, %v787
    %v800 = vor.u32 %v798, %v799
    %v801 = vshll.u32 920167782, %v786
    %v802 = vshrl.u32 1326507024, %v787
    %v803 = vor.u32 %v801, %v802
    %vm804 = vcmp.lt.s32.totalorder %v785, 1
    %vm805 = vcmp.lt.s32.totalorder %v785, 2
    %vm806 = vcmp.lt.s32.totalorder %v785, 3
    %vm807 = vcmp.lt.s32.totalorder %v785, 4
    %v808 = vsel %vm804, %v788, %v791
    %v809 = vsel %vm807, %v797, 2102212464
    %v810 = vsel %vm806, %v794, %v809
    %v811 = vsel %vm805, %v808, %v810
    %v812 = vsel %vm804, %v791, %v794
    %v813 = vsel %vm807, %v800, 920167782
    %v814 = vsel %vm806, %v797, %v813
    %v815 = vsel %vm805, %v812, %v814
    %v816 = vsel %vm804, %v794, %v797
    %v817 = vsel %vm807, %v803, 1326507024
    %v818 = vsel %vm806, %v800, %v817
    %v819 = vsel %vm805, %v816, %v818
    %v820 = vshll.u32 %v780, 8
    %v821 = vmul.u32.u64.compose %v820, %v819
    %v822 = vextract.low.u32 %v821
    %v823 = vextract.high.u32 %v821
    %v824 = vmul.u32.u64.compose %v820, %v815
    %v825 = vextract.low.u32 %v824
    %v826 = vextract.high.u32 %v824
    %v827 = vmul.u32 %v820, %v811
    %v828 = vadd.s32 %v823, %v825
    %vm829 = vc.u32 %v823, %v825
    %v830 = vadd.s32 %v826, 1
    %v831 = vsel %vm829, %v830, %v826
    %v832 = vadd.s32 %v827, %v831
    %v833 = vadd.s32 %v832, 536870912
    %v834 = vshrl.u32 %v833, 30
    %v835 = vshll.u32 %v834, 30
    %v836 = vsub.s32 %v832, %v835
    %vm837 = vcmp.lt.s32.totalorder %v836, 0
    %v838 = vsub.s32 0, %v836
    %v839 = vsel %vm837, %v838, %v836
    %v840 = vclz %v839
    %v841 = vsub.s32 %v840, 2
    %vm842 = vcmp.gt.s32.totalorder 0, %v841
    %v843 = vsel %vm842, 0, %v841
    %v844 = vsub.s32 32, %v843
    %v845 = vshll.u32 %v836, %v843
    %v846 = vshrl.u32 %v828, %v844
    %v847 = vor.u32 %v845, %v846
    %v848 = vsub.s32 4294967266, %v843
    %v849 = vadd.s32 %v848, 127
    %v850 = vshll.u32 %v849, 23
    %v851 = vor.u32 4788187, %v850
    %v852 = vand.u32 2147483647, %v851
    %v854 = vcvt.s32.f32 %v847
    %v855 = vmul.f32 %v854, %v852
    %v856 = vxor.u32 %v855, 2147483648
    %v857 = vsel %vm774, %v856, %v855
    %v858 = vsub.s32 4, %v834
    %v859 = vsel %vm774, %v858, %v834
    %v860 = vsel %vm773, %v665, %v857
    %v861 = vsel %vm773, 0, %v859
    %v862 = vcosq.f32.pop %v860
    %v863 = vsinq.f32.pop %v860
    %vm864 = vweird.f32 %v665
    %v865 = vand.u32 %v861, 3
    %vm866 = vcmp.lt.s32.totalorder %v865, 2
    %vm867 = vcmp.eq.s32.totalorder %v865, 0
    %v868 = vxor.u32 %v863, 2147483648
    %v869 = vsel %vm867, %v862, %v868
    %vm870 = vcmp.eq.s32.totalorder %v865, 2
    %v871 = vxor.u32 %v862, 2147483648
    %v872 = vsel %vm870, %v871, %v863
    %v873 = vsel %vm866, %v869, %v872
    %v874 = vsel %vm864, nan, %v873
    %s875 = scalar_lea.vmem [#allocation5], 72
    %876 = vst [vmem:[%s875] sm:$0xff] %v874
    %v877 = vmul.f32 %v29, 107.23303
    %v878 = vand.u32 2147483647, %v877
    %vm879 = vcmp.le.f32.partialorder %v878, 0.7853982
    %vm880 = vcmp.lt.s32.totalorder %v877, 0
    %v881 = vand.u32 %v877, 2139095040
    %v882 = vshrl.u32 %v881, 23
    %v883 = vsub.s32 %v882, 127
    %v884 = vand.u32 2147483647, %v877
    %v885 = vand.u32 %v884, 8388607
    %v886 = vor.u32 %v885, 8388608
    %v887 = vsub.s32 0, %v886
    %v888 = vadd.s32 %v883, 1
    %vm889 = vcmp.gt.s32.totalorder %v888, 0
    %v890 = vsel %vm889, %v888, 0
    %v891 = vshrl.u32 %v890, 5
    %v892 = vand.u32 %v890, 31
    %v893 = vsub.s32 32, %v892
    %v894 = vshrl.u32 683565275, %v893
    %v895 = vshll.u32 683565275, %v892
    %v896 = vshrl.u32 2475754826, %v893
    %v897 = vor.u32 %v895, %v896
    %v898 = vshll.u32 2475754826, %v892
    %v899 = vshrl.u32 2131351028, %v893
    %v900 = vor.u32 %v898, %v899
    %v901 = vshll.u32 2131351028, %v892
    %v902 = vshrl.u32 2102212464, %v893
    %v903 = vor.u32 %v901, %v902
    %v904 = vshll.u32 2102212464, %v892
    %v905 = vshrl.u32 920167782, %v893
    %v906 = vor.u32 %v904, %v905
    %v907 = vshll.u32 920167782, %v892
    %v908 = vshrl.u32 1326507024, %v893
    %v909 = vor.u32 %v907, %v908
    %vm910 = vcmp.lt.s32.totalorder %v891, 1
    %vm911 = vcmp.lt.s32.totalorder %v891, 2
    %vm912 = vcmp.lt.s32.totalorder %v891, 3
    %vm913 = vcmp.lt.s32.totalorder %v891, 4
    %v914 = vsel %vm910, %v894, %v897
    %v915 = vsel %vm913, %v903, 2102212464
    %v916 = vsel %vm912, %v900, %v915
    %v917 = vsel %vm911, %v914, %v916
    %v918 = vsel %vm910, %v897, %v900
    %v919 = vsel %vm913, %v906, 920167782
    %v920 = vsel %vm912, %v903, %v919
    %v921 = vsel %vm911, %v918, %v920
    %v922 = vsel %vm910, %v900, %v903
    %v923 = vsel %vm913, %v909, 1326507024
    %v924 = vsel %vm912, %v906, %v923
    %v925 = vsel %vm911, %v922, %v924
    %v926 = vshll.u32 %v886, 8
    %v927 = vmul.u32.u64.compose %v926, %v925
    %v928 = vextract.low.u32 %v927
    %v929 = vextract.high.u32 %v927
    %v930 = vmul.u32.u64.compose %v926, %v921
    %v931 = vextract.low.u32 %v930
    %v932 = vextract.high.u32 %v930
    %v933 = vmul.u32 %v926, %v917
    %v934 = vadd.s32 %v929, %v931
    %vm935 = vc.u32 %v929, %v931
    %v936 = vadd.s32 %v932, 1
    %v937 = vsel %vm935, %v936, %v932
    %v938 = vadd.s32 %v933, %v937
    %v939 = vadd.s32 %v938, 536870912
    %v940 = vshrl.u32 %v939, 30
    %v941 = vshll.u32 %v940, 30
    %v942 = vsub.s32 %v938, %v941
    %vm943 = vcmp.lt.s32.totalorder %v942, 0
    %v944 = vsub.s32 0, %v942
    %v945 = vsel %vm943, %v944, %v942
    %v946 = vclz %v945
    %v947 = vsub.s32 %v946, 2
    %vm948 = vcmp.gt.s32.totalorder 0, %v947
    %v949 = vsel %vm948, 0, %v947
    %v950 = vsub.s32 32, %v949
    %v951 = vshll.u32 %v942, %v949
    %v952 = vshrl.u32 %v934, %v950
    %v953 = vor.u32 %v951, %v952
    %v954 = vsub.s32 4294967266, %v949
    %v955 = vadd.s32 %v954, 127
    %v956 = vshll.u32 %v955, 23
    %v957 = vor.u32 4788187, %v956
    %v958 = vand.u32 2147483647, %v957
    %v960 = vcvt.s32.f32 %v953
    %v961 = vmul.f32 %v960, %v958
    %v962 = vxor.u32 %v961, 2147483648
    %v963 = vsel %vm880, %v962, %v961
    %v964 = vsub.s32 4, %v940
    %v965 = vsel %vm880, %v964, %v940
    %v966 = vsel %vm879, %v877, %v963
    %v967 = vsel %vm879, 0, %v965
    %v968 = vcosq.f32.pop %v966
    %v969 = vsinq.f32.pop %v966
    %vm970 = vweird.f32 %v877
    %v971 = vadd.s32 %v967, 3
    %v972 = vand.u32 %v971, 3
    %vm973 = vcmp.lt.s32.totalorder %v972, 2
    %vm974 = vcmp.eq.s32.totalorder %v972, 0
    %v975 = vxor.u32 %v969, 2147483648
    %v976 = vsel %vm974, %v968, %v975
    %vm977 = vcmp.eq.s32.totalorder %v972, 2
    %v978 = vxor.u32 %v968, 2147483648
    %v979 = vsel %vm977, %v978, %v969
    %v980 = vsel %vm973, %v976, %v979
    %v981 = vsel %vm970, nan, %v980
    %s982 = scalar_lea.vmem [#allocation5], 32
    %983 = vst [vmem:[%s982] sm:$0xff] %v981
    %v984 = vand.u32 2147483647, %v877
    %vm985 = vcmp.le.f32.partialorder %v984, 0.7853982
    %vm986 = vcmp.lt.s32.totalorder %v877, 0
    %v987 = vand.u32 %v877, 2139095040
    %v988 = vshrl.u32 %v987, 23
    %v989 = vsub.s32 %v988, 127
    %v990 = vand.u32 2147483647, %v877
    %v991 = vand.u32 %v990, 8388607
    %v992 = vor.u32 %v991, 8388608
    %v993 = vsub.s32 0, %v992
    %v994 = vadd.s32 %v989, 1
    %vm995 = vcmp.gt.s32.totalorder %v994, 0
    %v996 = vsel %vm995, %v994, 0
    %v997 = vshrl.u32 %v996, 5
    %v998 = vand.u32 %v996, 31
    %v999 = vsub.s32 32, %v998
    %v1000 = vshrl.u32 683565275, %v999
    %v1001 = vshll.u32 683565275, %v998
    %v1002 = vshrl.u32 2475754826, %v999
    %v1003 = vor.u32 %v1001, %v1002
    %v1004 = vshll.u32 2475754826, %v998
    %v1005 = vshrl.u32 2131351028, %v999
    %v1006 = vor.u32 %v1004, %v1005
    %v1007 = vshll.u32 2131351028, %v998
    %v1008 = vshrl.u32 2102212464, %v999
    %v1009 = vor.u32 %v1007, %v1008
    %v1010 = vshll.u32 2102212464, %v998
    %v1011 = vshrl.u32 920167782, %v999
    %v1012 = vor.u32 %v1010, %v1011
    %v1013 = vshll.u32 920167782, %v998
    %v1014 = vshrl.u32 1326507024, %v999
    %v1015 = vor.u32 %v1013, %v1014
    %vm1016 = vcmp.lt.s32.totalorder %v997, 1
    %vm1017 = vcmp.lt.s32.totalorder %v997, 2
    %vm1018 = vcmp.lt.s32.totalorder %v997, 3
    %vm1019 = vcmp.lt.s32.totalorder %v997, 4
    %v1020 = vsel %vm1016, %v1000, %v1003
    %v1021 = vsel %vm1019, %v1009, 2102212464
    %v1022 = vsel %vm1018, %v1006, %v1021
    %v1023 = vsel %vm1017, %v1020, %v1022
    %v1024 = vsel %vm1016, %v1003, %v1006
    %v1025 = vsel %vm1019, %v1012, 920167782
    %v1026 = vsel %vm1018, %v1009, %v1025
    %v1027 = vsel %vm1017, %v1024, %v1026
    %v1028 = vsel %vm1016, %v1006, %v1009
    %v1029 = vsel %vm1019, %v1015, 1326507024
    %v1030 = vsel %vm1018, %v1012, %v1029
    %v1031 = vsel %vm1017, %v1028, %v1030
    %v1032 = vshll.u32 %v992, 8
    %v1033 = vmul.u32.u64.compose %v1032, %v1031
    %v1034 = vextract.low.u32 %v1033
    %v1035 = vextract.high.u32 %v1033
    %v1036 = vmul.u32.u64.compose %v1032, %v1027
    %v1037 = vextract.low.u32 %v1036
    %v1038 = vextract.high.u32 %v1036
    %v1039 = vmul.u32 %v1032, %v1023
    %v1040 = vadd.s32 %v1035, %v1037
    %vm1041 = vc.u32 %v1035, %v1037
    %v1042 = vadd.s32 %v1038, 1
    %v1043 = vsel %vm1041, %v1042, %v1038
    %v1044 = vadd.s32 %v1039, %v1043
    %v1045 = vadd.s32 %v1044, 536870912
    %v1046 = vshrl.u32 %v1045, 30
    %v1047 = vshll.u32 %v1046, 30
    %v1048 = vsub.s32 %v1044, %v1047
    %vm1049 = vcmp.lt.s32.totalorder %v1048, 0
    %v1050 = vsub.s32 0, %v1048
    %v1051 = vsel %vm1049, %v1050, %v1048
    %v1052 = vclz %v1051
    %v1053 = vsub.s32 %v1052, 2
    %vm1054 = vcmp.gt.s32.totalorder 0, %v1053
    %v1055 = vsel %vm1054, 0, %v1053
    %v1056 = vsub.s32 32, %v1055
    %v1057 = vshll.u32 %v1048, %v1055
    %v1058 = vshrl.u32 %v1040, %v1056
    %v1059 = vor.u32 %v1057, %v1058
    %v1060 = vsub.s32 4294967266, %v1055
    %v1061 = vadd.s32 %v1060, 127
    %v1062 = vshll.u32 %v1061, 23
    %v1063 = vor.u32 4788187, %v1062
    %v1064 = vand.u32 2147483647, %v1063
    %v1066 = vcvt.s32.f32 %v1059
    %v1067 = vmul.f32 %v1066, %v1064
    %v1068 = vxor.u32 %v1067, 2147483648
    %v1069 = vsel %vm986, %v1068, %v1067
    %v1070 = vsub.s32 4, %v1046
    %v1071 = vsel %vm986, %v1070, %v1046
    %v1072 = vsel %vm985, %v877, %v1069
    %v1073 = vsel %vm985, 0, %v1071
    %v1074 = vcosq.f32.pop %v1072
    %v1075 = vsinq.f32.pop %v1072
    %vm1076 = vweird.f32 %v877
    %v1077 = vand.u32 %v1073, 3
    %vm1078 = vcmp.lt.s32.totalorder %v1077, 2
    %vm1079 = vcmp.eq.s32.totalorder %v1077, 0
    %v1080 = vxor.u32 %v1075, 2147483648
    %v1081 = vsel %vm1079, %v1074, %v1080
    %vm1082 = vcmp.eq.s32.totalorder %v1077, 2
    %v1083 = vxor.u32 %v1074, 2147483648
    %v1084 = vsel %vm1082, %v1083, %v1075
    %v1085 = vsel %vm1078, %v1081, %v1084
    %v1086 = vsel %vm1076, nan, %v1085
    %s1087 = scalar_lea.vmem [#allocation5], 80
    %1088 = vst [vmem:[%s1087] sm:$0xff] %v1086
    %v1089 = vmul.f32 %v29, 428.93213
    %v1090 = vand.u32 2147483647, %v1089
    %vm1091 = vcmp.le.f32.partialorder %v1090, 0.7853982
    %vm1092 = vcmp.lt.s32.totalorder %v1089, 0
    %v1093 = vand.u32 %v1089, 2139095040
    %v1094 = vshrl.u32 %v1093, 23
    %v1095 = vsub.s32 %v1094, 127
    %v1096 = vand.u32 2147483647, %v1089
    %v1097 = vand.u32 %v1096, 8388607
    %v1098 = vor.u32 %v1097, 8388608
    %v1099 = vsub.s32 0, %v1098
    %v1100 = vadd.s32 %v1095, 1
    %vm1101 = vcmp.gt.s32.totalorder %v1100, 0
    %v1102 = vsel %vm1101, %v1100, 0
    %v1103 = vshrl.u32 %v1102, 5
    %v1104 = vand.u32 %v1102, 31
    %v1105 = vsub.s32 32, %v1104
    %v1106 = vshrl.u32 683565275, %v1105
    %v1107 = vshll.u32 683565275, %v1104
    %v1108 = vshrl.u32 2475754826, %v1105
    %v1109 = vor.u32 %v1107, %v1108
    %v1110 = vshll.u32 2475754826, %v1104
    %v1111 = vshrl.u32 2131351028, %v1105
    %v1112 = vor.u32 %v1110, %v1111
    %v1113 = vshll.u32 2131351028, %v1104
    %v1114 = vshrl.u32 2102212464, %v1105
    %v1115 = vor.u32 %v1113, %v1114
    %v1116 = vshll.u32 2102212464, %v1104
    %v1117 = vshrl.u32 920167782, %v1105
    %v1118 = vor.u32 %v1116, %v1117
    %v1119 = vshll.u32 920167782, %v1104
    %v1120 = vshrl.u32 1326507024, %v1105
    %v1121 = vor.u32 %v1119, %v1120
    %vm1122 = vcmp.lt.s32.totalorder %v1103, 1
    %vm1123 = vcmp.lt.s32.totalorder %v1103, 2
    %vm1124 = vcmp.lt.s32.totalorder %v1103, 3
    %vm1125 = vcmp.lt.s32.totalorder %v1103, 4
    %v1126 = vsel %vm1122, %v1106, %v1109
    %v1127 = vsel %vm1125, %v1115, 2102212464
    %v1128 = vsel %vm1124, %v1112, %v1127
    %v1129 = vsel %vm1123, %v1126, %v1128
    %v1130 = vsel %vm1122, %v1109, %v1112
    %v1131 = vsel %vm1125, %v1118, 920167782
    %v1132 = vsel %vm1124, %v1115, %v1131
    %v1133 = vsel %vm1123, %v1130, %v1132
    %v1134 = vsel %vm1122, %v1112, %v1115
    %v1135 = vsel %vm1125, %v1121, 1326507024
    %v1136 = vsel %vm1124, %v1118, %v1135
    %v1137 = vsel %vm1123, %v1134, %v1136
    %v1138 = vshll.u32 %v1098, 8
    %v1139 = vmul.u32.u64.compose %v1138, %v1137
    %v1140 = vextract.low.u32 %v1139
    %v1141 = vextract.high.u32 %v1139
    %v1142 = vmul.u32.u64.compose %v1138, %v1133
    %v1143 = vextract.low.u32 %v1142
    %v1144 = vextract.high.u32 %v1142
    %v1145 = vmul.u32 %v1138, %v1129
    %v1146 = vadd.s32 %v1141, %v1143
    %vm1147 = vc.u32 %v1141, %v1143
    %v1148 = vadd.s32 %v1144, 1
    %v1149 = vsel %vm1147, %v1148, %v1144
    %v1150 = vadd.s32 %v1145, %v1149
    %v1151 = vadd.s32 %v1150, 536870912
    %v1152 = vshrl.u32 %v1151, 30
    %v1153 = vshll.u32 %v1152, 30
    %v1154 = vsub.s32 %v1150, %v1153
    %vm1155 = vcmp.lt.s32.totalorder %v1154, 0
    %v1156 = vsub.s32 0, %v1154
    %v1157 = vsel %vm1155, %v1156, %v1154
    %v1158 = vclz %v1157
    %v1159 = vsub.s32 %v1158, 2
    %vm1160 = vcmp.gt.s32.totalorder 0, %v1159
    %v1161 = vsel %vm1160, 0, %v1159
    %v1162 = vsub.s32 32, %v1161
    %v1163 = vshll.u32 %v1154, %v1161
    %v1164 = vshrl.u32 %v1146, %v1162
    %v1165 = vor.u32 %v1163, %v1164
    %v1166 = vsub.s32 4294967266, %v1161
    %v1167 = vadd.s32 %v1166, 127
    %v1168 = vshll.u32 %v1167, 23
    %v1169 = vor.u32 4788187, %v1168
    %v1170 = vand.u32 2147483647, %v1169
    %v1172 = vcvt.s32.f32 %v1165
    %v1173 = vmul.f32 %v1172, %v1170
    %v1174 = vxor.u32 %v1173, 2147483648
    %v1175 = vsel %vm1092, %v1174, %v1173
    %v1176 = vsub.s32 4, %v1152
    %v1177 = vsel %vm1092, %v1176, %v1152
    %v1178 = vsel %vm1091, %v1089, %v1175
    %v1179 = vsel %vm1091, 0, %v1177
    %v1180 = vcosq.f32.pop %v1178
    %v1181 = vsinq.f32.pop %v1178
    %vm1182 = vweird.f32 %v1089
    %v1183 = vadd.s32 %v1179, 3
    %v1184 = vand.u32 %v1183, 3
    %vm1185 = vcmp.lt.s32.totalorder %v1184, 2
    %vm1186 = vcmp.eq.s32.totalorder %v1184, 0
    %v1187 = vxor.u32 %v1181, 2147483648
    %v1188 = vsel %vm1186, %v1180, %v1187
    %vm1189 = vcmp.eq.s32.totalorder %v1184, 2
    %v1190 = vxor.u32 %v1180, 2147483648
    %v1191 = vsel %vm1189, %v1190, %v1181
    %v1192 = vsel %vm1185, %v1188, %v1191
    %v1193 = vsel %vm1182, nan, %v1192
    %s1194 = scalar_lea.vmem [#allocation5], 40
    %1195 = vst [vmem:[%s1194] sm:$0xff] %v1193
    %v1196 = vand.u32 2147483647, %v1089
    %vm1197 = vcmp.le.f32.partialorder %v1196, 0.7853982
    %vm1198 = vcmp.lt.s32.totalorder %v1089, 0
    %v1199 = vand.u32 %v1089, 2139095040
    %v1200 = vshrl.u32 %v1199, 23
    %v1201 = vsub.s32 %v1200, 127
    %v1202 = vand.u32 2147483647, %v1089
    %v1203 = vand.u32 %v1202, 8388607
    %v1204 = vor.u32 %v1203, 8388608
    %v1205 = vsub.s32 0, %v1204
    %v1206 = vadd.s32 %v1201, 1
    %vm1207 = vcmp.gt.s32.totalorder %v1206, 0
    %v1208 = vsel %vm1207, %v1206, 0
    %v1209 = vshrl.u32 %v1208, 5
    %v1210 = vand.u32 %v1208, 31
    %v1211 = vsub.s32 32, %v1210
    %v1212 = vshrl.u32 683565275, %v1211
    %v1213 = vshll.u32 683565275, %v1210
    %v1214 = vshrl.u32 2475754826, %v1211
    %v1215 = vor.u32 %v1213, %v1214
    %v1216 = vshll.u32 2475754826, %v1210
    %v1217 = vshrl.u32 2131351028, %v1211
    %v1218 = vor.u32 %v1216, %v1217
    %v1219 = vshll.u32 2131351028, %v1210
    %v1220 = vshrl.u32 2102212464, %v1211
    %v1221 = vor.u32 %v1219, %v1220
    %v1222 = vshll.u32 2102212464, %v1210
    %v1223 = vshrl.u32 920167782, %v1211
    %v1224 = vor.u32 %v1222, %v1223
    %v1225 = vshll.u32 920167782, %v1210
    %v1226 = vshrl.u32 1326507024, %v1211
    %v1227 = vor.u32 %v1225, %v1226
    %vm1228 = vcmp.lt.s32.totalorder %v1209, 1
    %vm1229 = vcmp.lt.s32.totalorder %v1209, 2
    %vm1230 = vcmp.lt.s32.totalorder %v1209, 3
    %vm1231 = vcmp.lt.s32.totalorder %v1209, 4
    %v1232 = vsel %vm1228, %v1212, %v1215
    %v1233 = vsel %vm1231, %v1221, 2102212464
    %v1234 = vsel %vm1230, %v1218, %v1233
    %v1235 = vsel %vm1229, %v1232, %v1234
    %v1236 = vsel %vm1228, %v1215, %v1218
    %v1237 = vsel %vm1231, %v1224, 920167782
    %v1238 = vsel %vm1230, %v1221, %v1237
    %v1239 = vsel %vm1229, %v1236, %v1238
    %v1240 = vsel %vm1228, %v1218, %v1221
    %v1241 = vsel %vm1231, %v1227, 1326507024
    %v1242 = vsel %vm1230, %v1224, %v1241
    %v1243 = vsel %vm1229, %v1240, %v1242
    %v1244 = vshll.u32 %v1204, 8
    %v1245 = vmul.u32.u64.compose %v1244, %v1243
    %v1246 = vextract.low.u32 %v1245
    %v1247 = vextract.high.u32 %v1245
    %v1248 = vmul.u32.u64.compose %v1244, %v1239
    %v1249 = vextract.low.u32 %v1248
    %v1250 = vextract.high.u32 %v1248
    %v1251 = vmul.u32 %v1244, %v1235
    %v1252 = vadd.s32 %v1247, %v1249
    %vm1253 = vc.u32 %v1247, %v1249
    %v1254 = vadd.s32 %v1250, 1
    %v1255 = vsel %vm1253, %v1254, %v1250
    %v1256 = vadd.s32 %v1251, %v1255
    %v1257 = vadd.s32 %v1256, 536870912
    %v1258 = vshrl.u32 %v1257, 30
    %v1259 = vshll.u32 %v1258, 30
    %v1260 = vsub.s32 %v1256, %v1259
    %vm1261 = vcmp.lt.s32.totalorder %v1260, 0
    %v1262 = vsub.s32 0, %v1260
    %v1263 = vsel %vm1261, %v1262, %v1260
    %v1264 = vclz %v1263
    %v1265 = vsub.s32 %v1264, 2
    %vm1266 = vcmp.gt.s32.totalorder 0, %v1265
    %v1267 = vsel %vm1266, 0, %v1265
    %v1268 = vsub.s32 32, %v1267
    %v1269 = vshll.u32 %v1260, %v1267
    %v1270 = vshrl.u32 %v1252, %v1268
    %v1271 = vor.u32 %v1269, %v1270
    %v1272 = vsub.s32 4294967266, %v1267
    %v1273 = vadd.s32 %v1272, 127
    %v1274 = vshll.u32 %v1273, 23
    %v1275 = vor.u32 4788187, %v1274
    %v1276 = vand.u32 2147483647, %v1275
    %v1278 = vcvt.s32.f32 %v1271
    %v1279 = vmul.f32 %v1278, %v1276
    %v1280 = vxor.u32 %v1279, 2147483648
    %v1281 = vsel %vm1198, %v1280, %v1279
    %v1282 = vsub.s32 4, %v1258
    %v1283 = vsel %vm1198, %v1282, %v1258
    %v1284 = vsel %vm1197, %v1089, %v1281
    %v1285 = vsel %vm1197, 0, %v1283
    %v1286 = vcosq.f32.pop %v1284
    %v1287 = vsinq.f32.pop %v1284
    %vm1288 = vweird.f32 %v1089
    %v1289 = vand.u32 %v1285, 3
    %vm1290 = vcmp.lt.s32.totalorder %v1289, 2
    %vm1291 = vcmp.eq.s32.totalorder %v1289, 0
    %v1292 = vxor.u32 %v1287, 2147483648
    %v1293 = vsel %vm1291, %v1286, %v1292
    %vm1294 = vcmp.eq.s32.totalorder %v1289, 2
    %v1295 = vxor.u32 %v1286, 2147483648
    %v1296 = vsel %vm1294, %v1295, %v1287
    %v1297 = vsel %vm1290, %v1293, %v1296
    %v1298 = vsel %vm1288, nan, %v1297
    %s1299 = scalar_lea.vmem [#allocation5], 88
    %1300 = vst [vmem:[%s1299] sm:$0xff] %v1298
    // Predicated region
    $region10: #{tpu_custom_call.1} parent=1 // pred_check
      _
    $region11: #{tpu_custom_call.1} parent=1 // pred_check_branch
      %1302 = sbr.rel (0) target = $region13
    $region12: #{tpu_custom_call.1} parent=1 // pred_region
      %s1304 = ssub.s32 1536, 1536
      %1305 = vsyncadd [#allocation4], %s1304
      %s1306 = sshll.u32 [#allocation5], 4
      %s1307 = int_to_ptr.vmem [resolvable:$true] %s1306
      %1312 = dma.vmem_to_hbm [thread:$0]  %s1307, 1536, %s1, [#allocation4], 128, 128, 8
    $region13: #{tpu_custom_call.1} parent=1 // pred_fallthru
      _
    // Predicated region
    $region14: #{tpu_custom_call.1} parent=1 // pred_check
      _
    $region15: #{tpu_custom_call.1} parent=1 // pred_check_branch
      %1314 = sbr.rel (0) target = $region17
    $region16: #{tpu_custom_call.1} parent=1 // pred_region
      %1315 = dma.done [#allocation4], 1536
    $region17: #{tpu_custom_call.1} parent=1 // pred_fallthru
      _
    %1316 = vsyncpa [#allocation3], 1
    %1317 = vsyncpa [#allocation4], 1

</llo_original>
